<compile_context>
chip_gen: v7x
topology: tpu7x:2x2x1
jax: 0.10.0
libtpu: 0.0.40
codegen_flags: <defaults>
</compile_context>

<pallas_src>
import functools

import jax
import jax.numpy as jnp
from jax.experimental import pallas as pl
from jax.experimental.pallas import tpu as pltpu

_MIB = 1024 * 1024


def _pred_kernel(x_ref, w_ref, b_ref, o_ref):
    # x_ref: (TB, Cin, TL)  w_ref: (Cout, Cin)  b_ref: (Cout, 1)
    # o_ref: (TB, Cout, TL) -> lane-dense stores (HW on lanes, Cout on sublanes)
    tb = x_ref.shape[0]
    w = w_ref[...]
    b = b_ref[...]
    for i in range(tb):  # TB is static and capped small; one clean 2D MXU dot each
        acc = jnp.dot(w, x_ref[i], preferred_element_type=jnp.float32)
        o_ref[i] = jnp.tanh(acc + b).astype(o_ref.dtype)


def _round_up(v, m):
    return -(-v // m) * m


@functools.lru_cache(maxsize=1)
def _hw_defaults():
    """Generation-aware defaults (lane tile, per-step byte target, VMEM cap)."""
    vmem_cap_bytes = 128 * _MIB
    try:
        info = pltpu.get_tpu_info()
        vmem_cap_bytes = int(getattr(info, "vmem_capacity_bytes", vmem_cap_bytes))
    except Exception:
        pass
    if vmem_cap_bytes <= 64 * _MIB:
        # v7x-class: high HBM BW but only 64 MiB VMEM -> bigger tiles, tight cap.
        return 8192, 2 * _MIB, 32 * _MIB
    # v5e / v6e: 128 MiB VMEM; 4096-lane tiles already sit on the roofline plateau.
    return 4096, 2 * _MIB, 64 * _MIB


def _select_tiling(n, cin, hw, in_itemsize, lane_tile, target_step_bytes,
                   max_batch_block=32, min_grid_steps=8):
    # Lane tile: full HW if small, otherwise near-equal multiples of 128 so the
    # last block is not a thin masked remainder.
    if hw <= lane_tile:
        tl = hw
    else:
        num_lane_blocks = -(-hw // lane_tile)
        tl = _round_up(-(-hw // num_lane_blocks), 128)

    # Per-step byte target: big enough to amortize ~0.35us/step overhead, but
    # keep at least ~min_grid_steps steps for pipelining / megacore sharding.
    total_in_bytes = n * cin * hw * in_itemsize
    step_target = min(target_step_bytes,
                      max(64 * 1024, total_in_bytes // min_grid_steps))
    per_batch_bytes = cin * tl * in_itemsize
    tb = max(1, min(n, step_target // max(per_batch_bytes, 1), max_batch_block))

    # Degenerate tiny case (grid would be a single step): split the lane axis
    # so both TensorCores on a dual-TC chip get work.
    steps = (-(-n // tb)) * (-(-hw // tl))
    if steps < 2 and tl >= 256:
        tl = _round_up(-(-tl // 2), 128)
    return tb, tl


@functools.partial(jax.jit, static_argnames=("tb", "tl", "vmem_limit"))
def _pred_call(x, weight, bias, *, tb, tl, vmem_limit):
    n, cin, h, w_sp = x.shape
    cout = weight.shape[0]
    hw = h * w_sp

    # NCHW -> (N, Cin, H*W): free reshape; keep native input dtype (bf16 OK).
    x3d = x.reshape(n, cin, hw)
    w2d = weight.reshape(cout, cin).astype(x.dtype)
    b2d = bias.reshape(cout, 1).astype(jnp.float32)

    grid = (pl.cdiv(n, tb), pl.cdiv(hw, tl))

    itemsize = jnp.dtype(x.dtype).itemsize
    m_total = n * hw
    cost = pl.CostEstimate(
        flops=2 * m_total * cin * cout,
        transcendentals=m_total * cout,
        bytes_accessed=(m_total * (cin + cout) * itemsize
                        + (cin * cout + cout) * itemsize),
    )

    out3d = pl.pallas_call(
        _pred_kernel,
        out_shape=jax.ShapeDtypeStruct((n, cout, hw), x.dtype),
        grid=grid,
        in_specs=[
            # x: (TB, Cin, TL) slab per grid step.
            pl.BlockSpec((tb, cin, tl), lambda b, j: (b, 0, j)),
            # weight: full (Cout, Cin), resident across the grid.
            pl.BlockSpec((cout, cin), lambda b, j: (0, 0)),
            # bias: full (Cout, 1).
            pl.BlockSpec((cout, 1), lambda b, j: (0, 0)),
        ],
        out_specs=pl.BlockSpec((tb, cout, tl), lambda b, j: (b, 0, j)),
        compiler_params=pltpu.CompilerParams(
            dimension_semantics=("parallel", "parallel"),
            vmem_limit_bytes=vmem_limit,
        ),
        cost_estimate=cost,
    )(x3d, w2d, b2d)

    # (N, Cout, H*W) -> (N, Cout, H, W): free reshape, already NCHW.
    return out3d.reshape(n, cout, h, w_sp)


def pred_forward(x, weight, bias):
    """tanh(Conv2d(Cin->Cout, kernel_size=1)(x)); x is NCHW, weight (Cout,Cin[,1,1])."""
    n, cin, h, w_sp = x.shape
    hw = h * w_sp
    cout = weight.shape[0]
    in_itemsize = jnp.dtype(x.dtype).itemsize

    lane_tile, target_step_bytes, vmem_cap = _hw_defaults()
    tb, tl = _select_tiling(n, cin, hw, in_itemsize, lane_tile, target_step_bytes)

    # True double-buffer footprint: 2x x-tile + 2x out-tile + weight/bias, + headroom.
    footprint = (2 * tb * tl * (cin + cout) * in_itemsize
                 + 2 * (cout * cin + cout) * in_itemsize)
    vmem_limit = int(min(max(footprint + 2 * _MIB, 8 * _MIB), vmem_cap))

    return _pred_call(x, weight, bias, tb=tb, tl=tl, vmem_limit=vmem_limit)


def pred_reference(x, weight, bias):
    """Pure-JAX reference of F.tanh(Conv2d(..., kernel_size=1)(x))."""
    y = jnp.einsum("nchw,oc->nohw", x, weight) + bias[None, :, None, None]
    return jnp.tanh(y)


if __name__ == "__main__":
    key = jax.random.PRNGKey(0)
    k_x, k_w, k_b = jax.random.split(key, 3)

    # Module defaults: in_channels=64, out_channels=8, kernel_size=1
    N, CIN, COUT, H, W = 2, 64, 8, 16, 16

    x = jax.random.normal(k_x, (N, CIN, H, W), dtype=jnp.float32)

    # Deterministic synthetic parameter init (uniform, PyTorch-like fan-in scale).
    bound = 1.0 / (CIN ** 0.5)
    weight = jax.random.uniform(k_w, (COUT, CIN), minval=-bound, maxval=bound,
                                dtype=jnp.float32)
    bias = jax.random.uniform(k_b, (COUT,), minval=-bound, maxval=bound,
                              dtype=jnp.float32)

    out = pred_forward(x, weight, bias)
    out = jax.block_until_ready(out)

    ref = pred_reference(x, weight, bias)
    assert out.shape == (N, COUT, H, W), out.shape
    assert jnp.allclose(out, ref, atol=1e-5, rtol=1e-5), \
        float(jnp.max(jnp.abs(out - ref)))

    print("KERNEL_OK")
</pallas_src>

<mosaic_0001>
module attributes {stable_mosaic.version = 11 : i64} {
  func.func @_pred_kernel(%arg0: i32, %arg1: i32, %arg2: memref<1x64x256xf32, #tpu.memory_space<vmem>>, %arg3: memref<8x64xf32, #tpu.memory_space<vmem>>, %arg4: memref<8x1xf32, #tpu.memory_space<vmem>>, %arg5: memref<1x8x256xf32, #tpu.memory_space<vmem>>) attributes {dimension_semantics = [#tpu.dimension_semantics<parallel>, #tpu.dimension_semantics<parallel>], iteration_bounds = array<i64: 2, 1>, scalar_prefetch = 0 : i64, scratch_operands = 0 : i64, tpu.core_type = #tpu.core_type<tc>, window_params = [{transform_indices = @transform_0, window_bounds = array<i64: 1, 64, 256>}, {pipeline_mode = #tpu.pipeline_mode<synchronous>, transform_indices = @transform_1, window_bounds = array<i64: 8, 64>}, {pipeline_mode = #tpu.pipeline_mode<synchronous>, transform_indices = @transform_2, window_bounds = array<i64: 8, 1>}, {transform_indices = @transform_3, window_bounds = array<i64: 1, 8, 256>}]} {
    %c0 = arith.constant 0 : index
    %c0_0 = arith.constant 0 : index
    %0 = vector.load %arg3[%c0, %c0_0] : memref<8x64xf32, #tpu.memory_space<vmem>>, vector<8x64xf32>
    %c0_1 = arith.constant 0 : index
    %c0_2 = arith.constant 0 : index
    %1 = vector.load %arg4[%c0_1, %c0_2] : memref<8x1xf32, #tpu.memory_space<vmem>>, vector<8x1xf32>
    %c0_3 = arith.constant 0 : index
    %c0_4 = arith.constant 0 : index
    %c0_5 = arith.constant 0 : index
    %2 = vector.load %arg2[%c0_3, %c0_4, %c0_5] : memref<1x64x256xf32, #tpu.memory_space<vmem>>, vector<1x64x256xf32>
    %3 = vector.shape_cast %2 : vector<1x64x256xf32> to vector<64x256xf32>
    %cst = arith.constant dense<0.000000e+00> : vector<8x256xf32>
    %4 = tpu.matmul %0, %3, %cst {dimension_numbers = #tpu.dot_dimension_numbers<[1], [0], [0], [1], [0, 0, 1, 1], [], []>} : vector<8x64xf32>, vector<64x256xf32>, vector<8x256xf32> -> vector<8x256xf32>
    %5 = vector.broadcast %1 : vector<8x1xf32> to vector<8x256xf32>
    %6 = arith.addf %4, %5 : vector<8x256xf32>
    %7 = math.tanh %6 : vector<8x256xf32>
    %c0_6 = arith.constant 0 : index
    %c0_7 = arith.constant 0 : index
    %c0_8 = arith.constant 0 : index
    %8 = vector.load %arg5[%c0_6, %c0_7, %c0_8] : memref<1x8x256xf32, #tpu.memory_space<vmem>>, vector<1x8x256xf32>
    %9 = vector.shape_cast %8 : vector<1x8x256xf32> to vector<8x256xf32>
    %10 = vector.shape_cast %7 : vector<8x256xf32> to vector<1x8x256xf32>
    tpu.vector_store %arg5[%c0_6, %c0_7, %c0_8], %10 {strides = array<i32>} : memref<1x8x256xf32, #tpu.memory_space<vmem>>, vector<1x8x256xf32>,
    return
  }
  func.func @transform_0(%arg0: i32, %arg1: i32) -> (i32, i32, i32) {
    %c0_i32 = arith.constant 0 : i32
    %c0_i32_0 = arith.constant 0 : i32
    return %arg0, %c0_i32, %arg1 : i32, i32, i32
  }
  func.func @transform_1(%arg0: i32, %arg1: i32) -> (i32, i32) {
    %c0_i32 = arith.constant 0 : i32
    %c0_i32_0 = arith.constant 0 : i32
    %c0_i32_1 = arith.constant 0 : i32
    return %c0_i32, %c0_i32_0 : i32, i32
  }
  func.func @transform_2(%arg0: i32, %arg1: i32) -> (i32, i32) {
    %c0_i32 = arith.constant 0 : i32
    %c0_i32_0 = arith.constant 0 : i32
    %c0_i32_1 = arith.constant 0 : i32
    return %c0_i32, %c0_i32_0 : i32, i32
  }
  func.func @transform_3(%arg0: i32, %arg1: i32) -> (i32, i32, i32) {
    %c0_i32 = arith.constant 0 : i32
    %c0_i32_0 = arith.constant 0 : i32
    return %arg0, %c0_i32, %arg1 : i32, i32, i32
  }
}

</mosaic_0001>

<llo_original>
// kernel: _pred_call.1
$region0: #{_pred_call.1}
  #allocation0 [shape = 'u32[]', space=smem, size = 0x4, offset = 0x4, fixed_abs, tag = 'smem constant byte address 0x4 - core index']
  #allocation1 [shape = 'u32[144,128]{1,0:T(1,128)}', space=vmem, size = 0x12000, scoped, tag = 'internal scratch']
  %s0 = inlined_call_operand.vmem [shape: f32[2,64,256], index: 0, kind: input, shape index: {}]
  %s1 = inlined_call_operand.vmem [shape: f32[8,64], index: 1, kind: input, shape index: {}]
  %s2 = inlined_call_operand.vmem [shape: f32[8,1], index: 2, kind: input, shape index: {}]
  %s3 = inlined_call_operand.vmem [shape: f32[2,8,256], index: 3, kind: output, shape index: {}]
  %s4 = sld [smem:[#allocation0]]
  $region45: #{_pred_call.1} parent=0
    _
  %s6 = ssub.s32 1, %s4
  %s7 = scalar_select 0, %s6, %s4
  loop: start=0, step=1, limit=4
  $region2: #{_pred_call.1} parent=0 // loop_pre_header
    _
  $region3: #{_pred_call.1} parent=0 // loop_header
    %s9 = sphi 0, %s13
    %p10 = scmp.ge.s32.totalorder %s9, 4
    %s16 = sphi 0, %s28
    %s17 = sphi 0, %s24
    %s18 = sphi 0, %s16
    %s19 = sphi 0, %s17
    %s20 = sphi 0, %s18
    %s21 = sphi 0, %s19
    %s33 = sphi 0, %s35
    %s36 = sphi 0, %s33
    %s37 = sphi 0, %s36
    %s53 = sphi 0, %s37
    %s57 = sphi 0, %s57
    %s59 = sphi 0, %s57
    %s60 = sphi 0, %s59
    %s74 = sphi 0, %s60
    %s78 = sphi 0, %s78
    %s80 = sphi 0, %s78
    %s81 = sphi 0, %s80
    %s95 = sphi 0, %s81
    %s103 = sphi 0, %s105
    %s106 = sphi 0, %s103
    %s107 = sphi 0, %s106
    %s123 = sphi 0, %s107
  $region4: #{_pred_call.1} parent=0 // loop_header_branch
    %12 = sbr.rel (%p10) target = $region8
  $region5: #{_pred_call.1} parent=0 // loop_body
    %s14 = ssub.s32 %s9, 1
    %s15 = ssub.s32 %s9, 2
    %s22 = sadd.s32 1, %s17
    %p23 = scmp.ge.s32.totalorder %s22, 1
    %s24 = scalar_select %p23, 0, %s22
    %s25 = sadd.s32 1, %s16
    %s26 = scalar_select %p23, %s25, %s16
    %p27 = scmp.ge.s32.totalorder %s26, 2
    %s28 = scalar_select %p27, 0, %s26
    %s29 = ssub.s32 %s16, %s28
    %s30 = ssub.s32 %s17, %s24
    %s31 = sor.u32 %s29, %s30
    %p32 = scmp.eq.s32.totalorder %s31, 0
    %s34 = sadd.s32 %s33, 1
    %s35 = scalar_select %p32, %s33, %s34
    %p38 = pneg %p32
    %p39 = scmp.eq.s32.totalorder %s9, 1
    %p40 = por %p38, %p39
    %p41 = scmp.ne.s32.totalorder %s33, %s36
    %p42 = scmp.eq.s32.totalorder %s9, 0
    %p43 = por %p41, %p42
    %p44 = scmp.ne.s32.totalorder %s33, %s36
    %p45 = scmp.eq.s32.totalorder %s14, 1
    %p46 = por %p44, %p45
    %p47 = scmp.ne.s32.totalorder %s36, %s37
    %p48 = scmp.eq.s32.totalorder %s14, 0
    %p49 = por %p47, %p48
    %p50 = scmp.ne.s32.totalorder %s36, %s37
    %p51 = scmp.eq.s32.totalorder %s15, 1
    %p52 = por %p50, %p51
    %p54 = scmp.ne.s32.totalorder %s37, %s53
    %p55 = scmp.eq.s32.totalorder %s15, 0
    %p56 = por %p54, %p55
    %s58 = sadd.s32 %s57, 1
    %p61 = scmp.eq.s32.totalorder %s9, 1
    %p62 = scmp.ne.s32.totalorder %s57, %s59
    %p63 = scmp.eq.s32.totalorder %s9, 0
    %p64 = por %p62, %p63
    %p65 = scmp.ne.s32.totalorder %s57, %s59
    %p66 = scmp.eq.s32.totalorder %s14, 1
    %p67 = por %p65, %p66
    %p68 = scmp.ne.s32.totalorder %s59, %s60
    %p69 = scmp.eq.s32.totalorder %s14, 0
    %p70 = por %p68, %p69
    %p71 = scmp.ne.s32.totalorder %s59, %s60
    %p72 = scmp.eq.s32.totalorder %s15, 1
    %p73 = por %p71, %p72
    %p75 = scmp.ne.s32.totalorder %s60, %s74
    %p76 = scmp.eq.s32.totalorder %s15, 0
    %p77 = por %p75, %p76
    %s79 = sadd.s32 %s78, 1
    %p82 = scmp.eq.s32.totalorder %s9, 1
    %p83 = scmp.ne.s32.totalorder %s78, %s80
    %p84 = scmp.eq.s32.totalorder %s9, 0
    %p85 = por %p83, %p84
    %p86 = scmp.ne.s32.totalorder %s78, %s80
    %p87 = scmp.eq.s32.totalorder %s14, 1
    %p88 = por %p86, %p87
    %p89 = scmp.ne.s32.totalorder %s80, %s81
    %p90 = scmp.eq.s32.totalorder %s14, 0
    %p91 = por %p89, %p90
    %p92 = scmp.ne.s32.totalorder %s80, %s81
    %p93 = scmp.eq.s32.totalorder %s15, 1
    %p94 = por %p92, %p93
    %p96 = scmp.ne.s32.totalorder %s81, %s95
    %p97 = scmp.eq.s32.totalorder %s15, 0
    %p98 = por %p96, %p97
    %s99 = ssub.s32 %s16, %s28
    %s100 = ssub.s32 %s17, %s24
    %s101 = sor.u32 %s99, %s100
    %p102 = scmp.eq.s32.totalorder %s101, 0
    %s104 = sadd.s32 %s103, 1
    %s105 = scalar_select %p102, %s103, %s104
    %p108 = pneg %p102
    %p109 = scmp.eq.s32.totalorder %s9, 1
    %p110 = por %p108, %p109
    %p111 = scmp.ne.s32.totalorder %s103, %s106
    %p112 = scmp.eq.s32.totalorder %s9, 0
    %p113 = por %p111, %p112
    %p114 = scmp.ne.s32.totalorder %s103, %s106
    %p115 = scmp.eq.s32.totalorder %s14, 1
    %p116 = por %p114, %p115
    %p117 = scmp.ne.s32.totalorder %s106, %s107
    %p118 = scmp.eq.s32.totalorder %s14, 0
    %p119 = por %p117, %p118
    %p120 = scmp.ne.s32.totalorder %s106, %s107
    %p121 = scmp.eq.s32.totalorder %s15, 1
    %p122 = por %p120, %p121
    %p124 = scmp.ne.s32.totalorder %s107, %s123
    %p125 = scmp.eq.s32.totalorder %s15, 0
    %p126 = por %p124, %p125
    %p127 = scmp.le.s32.totalorder 1, %s9
    %p128 = scmp.lt.s32.totalorder %s9, 3
    %p129 = pnand %p127, %p128
    %p130 = pneg %p129
    // Predicated region
    $region9: #{_pred_call.1} parent=5 // pred_check
      _
    $region10: #{_pred_call.1} parent=5 // pred_check_branch
      %132 = sbr.rel (%p129) target = $region12
    $region11: #{_pred_call.1} parent=5 // pred_region
      %s133 = ssub.s32 %s9, 1
      // Predicated region
      $region13: #{_pred_call.1} parent=11 // pred_check
        %p134 = pneg %p70
      $region14: #{_pred_call.1} parent=11 // pred_check_branch
        %136 = sbr.rel (%p134) target = $region16
      $region15: #{_pred_call.1} parent=11 // pred_region
        _
      $region16: #{_pred_call.1} parent=11 // pred_fallthru
        _
      // Predicated region
      $region17: #{_pred_call.1} parent=11 // pred_check
        %p137 = pneg %p91
      $region18: #{_pred_call.1} parent=11 // pred_check_branch
        %139 = sbr.rel (%p137) target = $region20
      $region19: #{_pred_call.1} parent=11 // pred_region
        _
      $region20: #{_pred_call.1} parent=11 // pred_fallthru
        _
    $region12: #{_pred_call.1} parent=5 // pred_fallthru
      _
    %p140 = scmp.lt.s32.totalorder %s9, 2
    // Predicated region
    $region21: #{_pred_call.1} parent=5 // pred_check
      %p141 = pneg %p140
    $region22: #{_pred_call.1} parent=5 // pred_check_branch
      %143 = sbr.rel (%p141) target = $region24
    $region23: #{_pred_call.1} parent=5 // pred_region
      // Predicated region
      $region25: #{_pred_call.1} parent=23 // pred_check
        %p144 = pneg %p43
      $region26: #{_pred_call.1} parent=23 // pred_check_branch
        %146 = sbr.rel (%p144) target = $region28
      $region27: #{_pred_call.1} parent=23 // pred_region
        %s147 = smul.u32 2, %s17
        %p148 = scmp.lt.s32.totalorder %s16, 1
        %s149 = scalar_select %p148, %s16, 1
        %p150 = scmp.lt.s32.totalorder %s147, 1
        %s151 = scalar_select %p150, %s147, 1
        %s152 = smul.addr %s149, 16
        %s153 = sadd.s32 %s151, %s152
        %s154 = smul.addr %s153, 8
        %s155 = scalar_lea.vmem %s0, %s154
        %s156 = smul.u32 2, %s17
      $region28: #{_pred_call.1} parent=23 // pred_fallthru
        _
    $region24: #{_pred_call.1} parent=5 // pred_fallthru
      _
    %p157 = scmp.le.s32.totalorder 1, %s9
    %p158 = scmp.lt.s32.totalorder %s9, 3
    %p159 = pnand %p157, %p158
    %p160 = pneg %p159
    // Predicated region
    $region29: #{_pred_call.1} parent=5 // pred_check
      _
    $region30: #{_pred_call.1} parent=5 // pred_check_branch
      %162 = sbr.rel (%p159) target = $region32
    $region31: #{_pred_call.1} parent=5 // pred_region
      %s163 = ssub.s32 %s9, 1
      %s164 = smul.u32 2, %s19
      %p165 = scmp.lt.s32.totalorder %s18, 1
      %s166 = scalar_select %p165, %s18, 1
      %p167 = scmp.lt.s32.totalorder %s164, 1
      %s168 = scalar_select %p167, %s164, 1
      %s169 = smul.addr %s166, 16
      %s170 = sadd.s32 %s168, %s169
      %s171 = smul.addr %s170, 8
      %s172 = scalar_lea.vmem %s0, %s171
      %p173 = pneg %p49
      %p174 = pneg %p46
      %p175 = pneg %p70
      %p176 = pneg %p67
      %p177 = pneg %p91
      %p178 = pneg %p88
      %p179 = pneg %p119
      %p180 = pneg %p116
      %s181 = smul.u32 2, %s19
      %p182 = scmp.lt.s32.totalorder %s18, 1
      %s183 = scalar_select %p182, %s18, 1
      %p184 = scmp.lt.s32.totalorder %s181, 1
      %s185 = scalar_select %p184, %s181, 1
      %s186 = smul.addr %s183, 2
      %s187 = sadd.s32 %s185, %s186
      %s188 = smul.addr %s187, 8
      %s189 = scalar_lea.vmem %s3, %s188
      %s190 = smul.u32 2, %s19
      %p191 = scmp.lt.s32.totalorder %s18, 1
      %s192 = scalar_select %p191, %s18, 1
      %p193 = scmp.lt.s32.totalorder %s190, 1
      %s194 = scalar_select %p193, %s190, 1
      %s195 = smul.addr %s192, 16
      %s196 = sadd.s32 %s194, %s195
      %s197 = smul.addr %s196, 8
      %s198 = scalar_lea.vmem %s0, %s197
      %s199 = smul.u32 2, %s19
      %s200 = smul.u32 2, %s19
      %p201 = scmp.lt.s32.totalorder %s18, 1
      %s202 = scalar_select %p201, %s18, 1
      %p203 = scmp.lt.s32.totalorder %s200, 1
      %s204 = scalar_select %p203, %s200, 1
      %s205 = smul.addr %s202, 2
      %s206 = sadd.s32 %s204, %s205
      %s207 = smul.addr %s206, 8
      %s208 = scalar_lea.vmem %s3, %s207
      %s209 = smul.u32 2, %s19
      %v210 = vld [vmem:[%s1] sm:$0xff]
      %v211 = vld [vmem:[%s2] sm:$0xff]
      %v212 = vld [vmem:[%s198] sm:$0xff]
      %v213 = vld [vmem:[%s198 + $0x8] sm:$0xff]
      %v214 = vld [vmem:[%s198 + $0x10] sm:$0xff]
      %v215 = vld [vmem:[%s198 + $0x18] sm:$0xff]
      %v216 = vld [vmem:[%s198 + $0x20] sm:$0xff]
      %v217 = vld [vmem:[%s198 + $0x28] sm:$0xff]
      %v218 = vld [vmem:[%s198 + $0x30] sm:$0xff]
      %v219 = vld [vmem:[%s198 + $0x38] sm:$0xff]
      %v220 = vld [vmem:[%s198 + $0x40] sm:$0xff]
      %v221 = vld [vmem:[%s198 + $0x48] sm:$0xff]
      %v222 = vld [vmem:[%s198 + $0x50] sm:$0xff]
      %v223 = vld [vmem:[%s198 + $0x58] sm:$0xff]
      %v224 = vld [vmem:[%s198 + $0x60] sm:$0xff]
      %v225 = vld [vmem:[%s198 + $0x68] sm:$0xff]
      %v226 = vld [vmem:[%s198 + $0x70] sm:$0xff]
      %v227 = vld [vmem:[%s198 + $0x78] sm:$0xff]
      %229 = vset.pattern.permute.xlu0 0
      %230 = vperm.xlu0 %229, %v211
      %v231 = vpop.permute.xlu0 %230
      %vm233 = vcmask 523264
      %v235 = vsel %vm233, %v210, 0
      %237 = vmatprep.subr.mxu0 %v213
      %238 = vmatpush1.msra.mxu0 %v212
      %239 = vmatprep.subr.mxu0 %v215
      %240 = vmatpush1.msra.mxu0 %v214
      %241 = vmatprep.subr.mxu0 %v217
      %242 = vmatpush1.msra.mxu0 %v216
      %243 = vmatprep.subr.mxu0 %v219
      %244 = vmatpush1.msra.mxu0 %v218
      %245 = vmatprep.subr.mxu0 %v221
      %246 = vmatpush1.msra.mxu0 %v220
      %247 = vmatprep.subr.mxu0 %v223
      %248 = vmatpush1.msra.mxu0 %v222
      %249 = vmatprep.subr.mxu0 %v225
      %250 = vmatpush1.msra.mxu0 %v224
      %251 = vmatprep.subr.mxu0 %v227
      %252 = vmatpush1.msra.mxu0 %v226
      %253 = vmatprep.subr.mxu0 0.0
      %254 = vmatpush1.msra.mxu0 0.0
      %255 = vmatprep.subr.mxu0 0.0
      %256 = vmatpush1.msra.mxu0 0.0
      %257 = vmatprep.subr.mxu0 0.0
      %258 = vmatpush1.msra.mxu0 0.0
      %259 = vmatprep.subr.mxu0 0.0
      %260 = vmatpush1.msra.mxu0 0.0
      %261 = vmatprep.subr.mxu0 0.0
      %262 = vmatpush1.msra.mxu0 0.0
      %263 = vmatprep.subr.mxu0 0.0
      %264 = vmatpush1.msra.mxu0 0.0
      %265 = vmatprep.subr.mxu0 0.0
      %266 = vmatpush1.msra.mxu0 0.0
      %267 = vmatprep.subr.mxu0 0.0
      %268 = vmatpush1.msra.mxu0 0.0
      %269 = vmatprep.subr.mxu0 0.0
      %270 = vmatpush1.msra.mxu0 0.0
      %271 = vmatprep.subr.mxu0 0.0
      %272 = vmatpush1.msra.mxu0 0.0
      %273 = vmatprep.subr.mxu0 0.0
      %274 = vmatpush1.msra.mxu0 0.0
      %275 = vmatprep.subr.mxu0 0.0
      %276 = vmatpush1.msra.mxu0 0.0
      %277 = vmatprep.subr.mxu0 0.0
      %278 = vmatpush1.msra.mxu0 0.0
      %279 = vmatprep.subr.mxu0 0.0
      %280 = vmatpush1.msra.mxu0 0.0
      %281 = vmatprep.subr.mxu0 0.0
      %282 = vmatpush1.msra.mxu0 0.0
      %283 = vmatprep.subr.mxu0 0.0
      %284 = vmatpush1.msra.mxu0 0.0
      %285 = vmatprep.subr.mxu0 0.0
      %286 = vmatpush1.msra.mxu0 0.0
      %287 = vmatprep.subr.mxu0 0.0
      %288 = vmatpush1.msra.mxu0 0.0
      %289 = vmatprep.subr.mxu0 0.0
      %290 = vmatpush1.msra.mxu0 0.0
      %291 = vmatprep.subr.mxu0 0.0
      %292 = vmatpush1.msra.mxu0 0.0
      %293 = vmatprep.subr.mxu0 0.0
      %294 = vmatpush1.msra.mxu0 0.0
      %295 = vmatprep.subr.mxu0 0.0
      %296 = vmatpush1.msra.mxu0 0.0
      %297 = vmatprep.subr.mxu0 0.0
      %298 = vmatpush1.msra.mxu0 0.0
      %299 = vmatprep.subr.mxu0 0.0
      %300 = vmatpush1.msra.mxu0 0.0
      %301 = vmatprep.mubr.f32.mxu0 0.0
      %302 = vmatmul.mubr.f32.gmra.mrb[0].mxu0 %v235
      %v303 = vpop.f32.mrb[0].mxu0
      %v304 = vadd.f32 %v231, %v303
      %v305 = vpop.f32.mrb[0].mxu0
      %v306 = vadd.f32 %v231, %v305
      %307 = vdwg.mxu0
      %v308 = vtanh.pop %v304
      %v309 = vtanh.pop %v306
      %310 = vst [vmem:[%s208] sm:$0xff] %v308
      %311 = vst [vmem:[%s208 + $0x8] sm:$0xff] %v309
      %s312 = smul.u32 2, %s19
      %p313 = scmp.lt.s32.totalorder %s18, 1
      %s314 = scalar_select %p313, %s18, 1
      %p315 = scmp.lt.s32.totalorder %s312, 1
      %s316 = scalar_select %p315, %s312, 1
      %s317 = smul.addr %s314, 2
      %s318 = sadd.s32 %s316, %s317
      %s319 = smul.addr %s318, 8
      %s320 = scalar_lea.vmem %s3, %s319
      // Predicated region
      $region33: #{_pred_call.1} parent=31 // pred_check
        %p321 = pneg %p116
      $region34: #{_pred_call.1} parent=31 // pred_check_branch
        %323 = sbr.rel (%p321) target = $region36
      $region35: #{_pred_call.1} parent=31 // pred_region
        %s324 = smul.u32 2, %s19
      $region36: #{_pred_call.1} parent=31 // pred_fallthru
        _
    $region32: #{_pred_call.1} parent=5 // pred_fallthru
      _
    %p325 = scmp.le.s32.totalorder 2, %s9
    // Predicated region
    $region37: #{_pred_call.1} parent=5 // pred_check
      %p326 = pneg %p325
    $region38: #{_pred_call.1} parent=5 // pred_check_branch
      %328 = sbr.rel (%p326) target = $region40
    $region39: #{_pred_call.1} parent=5 // pred_region
      %s329 = ssub.s32 %s9, 2
      // Predicated region
      $region41: #{_pred_call.1} parent=39 // pred_check
        %p330 = pneg %p122
      $region42: #{_pred_call.1} parent=39 // pred_check_branch
        %332 = sbr.rel (%p330) target = $region44
      $region43: #{_pred_call.1} parent=39 // pred_region
        %s333 = smul.u32 2, %s21
        %p334 = scmp.lt.s32.totalorder %s20, 1
        %s335 = scalar_select %p334, %s20, 1
        %p336 = scmp.lt.s32.totalorder %s333, 1
        %s337 = scalar_select %p336, %s333, 1
        %s338 = smul.addr %s335, 2
        %s339 = sadd.s32 %s337, %s338
        %s340 = smul.addr %s339, 8
        %s341 = scalar_lea.vmem %s3, %s340
      $region44: #{_pred_call.1} parent=39 // pred_fallthru
        _
    $region40: #{_pred_call.1} parent=5 // pred_fallthru
      _
  $region6: #{_pred_call.1} parent=0 // loop_footer
    %s13 = sadd.s32 1, %s9
  $region7: #{_pred_call.1} parent=0 // loop_footer_branch
    %8 = sbr.rel target = $region3
  $region8: #{_pred_call.1} parent=0 // loop_exit
    _

</llo_original>
